<compile_context>
chip_gen: v7x
topology: tpu7x:2x2x1
jax: 0.10.0
libtpu: 0.0.40
codegen_flags: <defaults>
</compile_context>

<pallas_src>
import functools

import jax
import jax.numpy as jnp
from jax import lax
from jax.experimental import pallas as pl
from jax.experimental.pallas import tpu as pltpu

LN_EPS = 1e-5


def _layernorm(h, gamma, beta):
    # Single-pass statistics: one reduction pass for sum and sum-of-squares.
    n = h.shape[-1]
    inv_n = 1.0 / n
    s = jnp.sum(h, axis=-1, keepdims=True)
    ss = jnp.sum(h * h, axis=-1, keepdims=True)
    mu = s * inv_n
    var = ss * inv_n - mu * mu
    return (h - mu) * lax.rsqrt(var + LN_EPS) * gamma + beta


def encoder_mlp_kernel(x_ref,
                       w1_ref, b1_ref, g1_ref, be1_ref,
                       w2_ref, b2_ref, g2_ref, be2_ref,
                       w3_ref, b3_ref,
                       o_ref):
    # fc1 -> ln1 -> relu   (bf16 @ bf16 on the MXU, f32 accumulate)
    h = jnp.dot(x_ref[...], w1_ref[...],
                preferred_element_type=jnp.float32) + b1_ref[...]
    h = jnp.maximum(_layernorm(h, g1_ref[...], be1_ref[...]), 0.0)

    # fc2 -> ln2 -> relu
    h = jnp.dot(h.astype(jnp.bfloat16), w2_ref[...],
                preferred_element_type=jnp.float32) + b2_ref[...]
    h = jnp.maximum(_layernorm(h, g2_ref[...], be2_ref[...]), 0.0)

    # fc3 -> tanh  (tanh lowers to the EUP slot; free alongside VPU work)
    h = jnp.dot(h.astype(jnp.bfloat16), w3_ref[...],
                preferred_element_type=jnp.float32) + b3_ref[...]
    o_ref[...] = jnp.tanh(h).astype(o_ref.dtype)


def _pick_block_b(B):
    # Prefer big row tiles for MXU utilization, but keep >=2 grid steps when that
    # does not shrink the tile below 128 rows (v7x megacore has 2 TensorCores).
    for cand in (256, 128):
        if B % cand == 0 and B // cand >= 2:
            return cand
    # bf16-friendly tile sizes (multiples of 16 sublanes); otherwise take the whole batch.
    for cand in (512, 256, 128, 64, 32, 16):
        if B % cand == 0:
            return cand
    return B


@functools.partial(jax.jit, static_argnames=("block_b",))
def encoder_mlp(x, params, block_b=None):
    (w1, b1, g1, be1, w2, b2, g2, be2, w3, b3) = params
    B, D_in = x.shape
    D1 = w1.shape[1]
    D2 = w2.shape[1]
    D3 = w3.shape[1]
    if block_b is None:
        block_b = _pick_block_b(B)
    assert B % block_b == 0

    x_bf16 = x.astype(jnp.bfloat16)

    # Weights / LN params are resident across the whole grid (constant index_map).
    # TODO(synk): for multi-thousand feature dims on v7x (64 MiB VMEM), K-tile the
    # weights with an "arbitrary" reduction axis instead of full-weight residency.
    full = lambda shape: pl.BlockSpec(shape, lambda i: (0, 0))

    flops = 2 * B * (D_in * D1 + D1 * D2 + D2 * D3)
    bytes_accessed = (
        x_bf16.size * 2                                   # bf16 activations in
        + (w1.size + w2.size + w3.size) * 2               # bf16 weights
        + (b1.size + g1.size + be1.size
           + b2.size + g2.size + be2.size + b3.size) * 4  # f32 bias / LN params
        + B * D3 * 4)                                     # f32 output
    transcendentals = B * (2 + D3)                        # 2 rsqrt per row + tanh per output

    return pl.pallas_call(
        encoder_mlp_kernel,
        out_shape=jax.ShapeDtypeStruct((B, D3), jnp.float32),
        grid_spec=pltpu.PrefetchScalarGridSpec(
            num_scalar_prefetch=0,
            grid=(B // block_b,),
            in_specs=[
                pl.BlockSpec((block_b, D_in), lambda i: (i, 0)),   # x tile
                full((D_in, D1)), full((1, D1)), full((1, D1)), full((1, D1)),
                full((D1, D2)), full((1, D2)), full((1, D2)), full((1, D2)),
                full((D2, D3)), full((1, D3)),
            ],
            out_specs=pl.BlockSpec((block_b, D3), lambda i: (i, 0)),
        ),
        compiler_params=pltpu.CompilerParams(
            dimension_semantics=("parallel",)),
        cost_estimate=pl.CostEstimate(
            flops=flops,
            transcendentals=transcendentals,
            bytes_accessed=bytes_accessed),
    )(x_bf16, w1, b1, g1, be1, w2, b2, g2, be2, w3, b3)


def init_params(key, input_dim, embedding_dim=256):
    d1 = embedding_dim // 4
    d2 = embedding_dim // 2
    d3 = embedding_dim
    k1, k2, k3 = jax.random.split(key, 3)

    def xavier_normal(k, fan_in, fan_out):
        std = (2.0 / (fan_in + fan_out)) ** 0.5
        # stored as (in, out): x @ W matches PyTorch's x @ weight.T; bf16 storage
        # halves weight DMA traffic and hits the native bf16 MXU path.
        w = std * jax.random.normal(k, (fan_in, fan_out), dtype=jnp.float32)
        return w.astype(jnp.bfloat16)

    w1 = xavier_normal(k1, input_dim, d1)
    w2 = xavier_normal(k2, d1, d2)
    w3 = xavier_normal(k3, d2, d3)
    b1 = jnp.zeros((1, d1), jnp.float32)
    b2 = jnp.zeros((1, d2), jnp.float32)
    b3 = jnp.zeros((1, d3), jnp.float32)
    g1 = jnp.ones((1, d1), jnp.float32)
    be1 = jnp.zeros((1, d1), jnp.float32)
    g2 = jnp.ones((1, d2), jnp.float32)
    be2 = jnp.zeros((1, d2), jnp.float32)
    return (w1, b1, g1, be1, w2, b2, g2, be2, w3, b3)


def reference_mlp(x, params):
    # Pure-JAX reference mirroring the kernel's bf16-input / f32-accumulate math.
    (w1, b1, g1, be1, w2, b2, g2, be2, w3, b3) = params
    f32 = jnp.float32
    h = x.astype(jnp.bfloat16).astype(f32) @ w1.astype(f32) + b1
    h = jnp.maximum(_layernorm(h, g1, be1), 0.0)
    h = h.astype(jnp.bfloat16).astype(f32) @ w2.astype(f32) + b2
    h = jnp.maximum(_layernorm(h, g2, be2), 0.0)
    h = h.astype(jnp.bfloat16).astype(f32) @ w3.astype(f32) + b3
    return jnp.tanh(h)


if __name__ == "__main__":
    key = jax.random.PRNGKey(0)
    kx, kp = jax.random.split(key)

    batch, input_dim, embedding_dim = 16, 32, 256
    x = jax.random.normal(kx, (batch, input_dim), dtype=jnp.float32)
    params = init_params(kp, input_dim, embedding_dim)

    out = jax.block_until_ready(encoder_mlp(x, params))

    ref = reference_mlp(x, params)
    assert out.shape == (batch, embedding_dim)
    max_err = jnp.max(jnp.abs(out - ref))
    assert jnp.allclose(out, ref, atol=5e-3, rtol=5e-3), f"max err {max_err}"
    print("KERNEL_OK")
</pallas_src>

<mosaic_0001>
module attributes {stable_mosaic.version = 11 : i64} {
  func.func @encoder_mlp_kernel(%arg0: i32, %arg1: memref<16x32xbf16, #tpu.memory_space<vmem>>, %arg2: memref<32x64xbf16, #tpu.memory_space<vmem>>, %arg3: memref<1x64xf32, #tpu.memory_space<vmem>>, %arg4: memref<1x64xf32, #tpu.memory_space<vmem>>, %arg5: memref<1x64xf32, #tpu.memory_space<vmem>>, %arg6: memref<64x128xbf16, #tpu.memory_space<vmem>>, %arg7: memref<1x128xf32, #tpu.memory_space<vmem>>, %arg8: memref<1x128xf32, #tpu.memory_space<vmem>>, %arg9: memref<1x128xf32, #tpu.memory_space<vmem>>, %arg10: memref<128x256xbf16, #tpu.memory_space<vmem>>, %arg11: memref<1x256xf32, #tpu.memory_space<vmem>>, %arg12: memref<16x256xf32, #tpu.memory_space<vmem>>) attributes {dimension_semantics = [#tpu.dimension_semantics<parallel>], iteration_bounds = array<i64: 1>, scalar_prefetch = 0 : i64, scratch_operands = 0 : i64, tpu.core_type = #tpu.core_type<tc>, window_params = [{transform_indices = @transform_0, window_bounds = array<i64: 16, 32>}, {pipeline_mode = #tpu.pipeline_mode<synchronous>, transform_indices = @transform_1, window_bounds = array<i64: 32, 64>}, {pipeline_mode = #tpu.pipeline_mode<synchronous>, transform_indices = @transform_2, window_bounds = array<i64: 1, 64>}, {pipeline_mode = #tpu.pipeline_mode<synchronous>, transform_indices = @transform_3, window_bounds = array<i64: 1, 64>}, {pipeline_mode = #tpu.pipeline_mode<synchronous>, transform_indices = @transform_4, window_bounds = array<i64: 1, 64>}, {pipeline_mode = #tpu.pipeline_mode<synchronous>, transform_indices = @transform_5, window_bounds = array<i64: 64, 128>}, {pipeline_mode = #tpu.pipeline_mode<synchronous>, transform_indices = @transform_6, window_bounds = array<i64: 1, 128>}, {pipeline_mode = #tpu.pipeline_mode<synchronous>, transform_indices = @transform_7, window_bounds = array<i64: 1, 128>}, {pipeline_mode = #tpu.pipeline_mode<synchronous>, transform_indices = @transform_8, window_bounds = array<i64: 1, 128>}, {pipeline_mode = #tpu.pipeline_mode<synchronous>, transform_indices = @transform_9, window_bounds = array<i64: 128, 256>}, {pipeline_mode = #tpu.pipeline_mode<synchronous>, transform_indices = @transform_10, window_bounds = array<i64: 1, 256>}, {transform_indices = @transform_11, window_bounds = array<i64: 16, 256>}]} {
    %c0 = arith.constant 0 : index
    %c0_0 = arith.constant 0 : index
    %0 = vector.load %arg1[%c0, %c0_0] : memref<16x32xbf16, #tpu.memory_space<vmem>>, vector<16x32xbf16>
    %c0_1 = arith.constant 0 : index
    %c0_2 = arith.constant 0 : index
    %1 = vector.load %arg2[%c0_1, %c0_2] : memref<32x64xbf16, #tpu.memory_space<vmem>>, vector<32x64xbf16>
    %cst = arith.constant dense<0.000000e+00> : vector<16x64xf32>
    %2 = tpu.matmul %0, %1, %cst {dimension_numbers = #tpu.dot_dimension_numbers<[1], [0], [0], [1], [0, 0, 1, 1], [], []>} : vector<16x32xbf16>, vector<32x64xbf16>, vector<16x64xf32> -> vector<16x64xf32>
    %c0_3 = arith.constant 0 : index
    %c0_4 = arith.constant 0 : index
    %3 = vector.load %arg3[%c0_3, %c0_4] : memref<1x64xf32, #tpu.memory_space<vmem>>, vector<1x64xf32>
    %4 = vector.broadcast %3 : vector<1x64xf32> to vector<16x64xf32>
    %5 = arith.addf %2, %4 : vector<16x64xf32>
    %c0_5 = arith.constant 0 : index
    %c0_6 = arith.constant 0 : index
    %6 = vector.load %arg4[%c0_5, %c0_6] : memref<1x64xf32, #tpu.memory_space<vmem>>, vector<1x64xf32>
    %c0_7 = arith.constant 0 : index
    %c0_8 = arith.constant 0 : index
    %7 = vector.load %arg5[%c0_7, %c0_8] : memref<1x64xf32, #tpu.memory_space<vmem>>, vector<1x64xf32>
    %cst_9 = arith.constant dense<0.000000e+00> : vector<16xf32>
    %8 = vector.multi_reduction <add>, %5, %cst_9 [1] : vector<16x64xf32> to vector<16xf32>
    %9 = vector.shape_cast %8 : vector<16xf32> to vector<16x1xf32>
    %10 = arith.mulf %5, %5 : vector<16x64xf32>
    %cst_10 = arith.constant dense<0.000000e+00> : vector<16xf32>
    %11 = vector.multi_reduction <add>, %10, %cst_10 [1] : vector<16x64xf32> to vector<16xf32>
    %12 = vector.shape_cast %11 : vector<16xf32> to vector<16x1xf32>
    %cst_11 = arith.constant 1.562500e-02 : f32
    %13 = vector.broadcast %cst_11 : f32 to vector<16x1xf32>
    %14 = arith.mulf %9, %13 : vector<16x1xf32>
    %cst_12 = arith.constant 1.562500e-02 : f32
    %15 = vector.broadcast %cst_12 : f32 to vector<16x1xf32>
    %16 = arith.mulf %12, %15 : vector<16x1xf32>
    %17 = arith.mulf %14, %14 : vector<16x1xf32>
    %18 = arith.subf %16, %17 : vector<16x1xf32>
    %19 = vector.broadcast %14 : vector<16x1xf32> to vector<16x64xf32>
    %20 = arith.subf %5, %19 : vector<16x64xf32>
    %cst_13 = arith.constant 9.99999974E-6 : f32
    %21 = vector.broadcast %cst_13 : f32 to vector<16x1xf32>
    %22 = arith.addf %18, %21 : vector<16x1xf32>
    %23 = math.rsqrt %22 : vector<16x1xf32>
    %24 = vector.broadcast %23 : vector<16x1xf32> to vector<16x64xf32>
    %25 = arith.mulf %20, %24 : vector<16x64xf32>
    %26 = vector.broadcast %6 : vector<1x64xf32> to vector<16x64xf32>
    %27 = arith.mulf %25, %26 : vector<16x64xf32>
    %28 = vector.broadcast %7 : vector<1x64xf32> to vector<16x64xf32>
    %29 = arith.addf %27, %28 : vector<16x64xf32>
    %cst_14 = arith.constant 0.000000e+00 : f32
    %30 = vector.broadcast %cst_14 : f32 to vector<16x64xf32>
    %31 = arith.maximumf %29, %30 : vector<16x64xf32>
    %32 = arith.truncf %31 : vector<16x64xf32> to vector<16x64xbf16>
    %c0_15 = arith.constant 0 : index
    %c0_16 = arith.constant 0 : index
    %33 = vector.load %arg6[%c0_15, %c0_16] : memref<64x128xbf16, #tpu.memory_space<vmem>>, vector<64x128xbf16>
    %cst_17 = arith.constant dense<0.000000e+00> : vector<16x128xf32>
    %34 = tpu.matmul %32, %33, %cst_17 {dimension_numbers = #tpu.dot_dimension_numbers<[1], [0], [0], [1], [0, 0, 1, 1], [], []>} : vector<16x64xbf16>, vector<64x128xbf16>, vector<16x128xf32> -> vector<16x128xf32>
    %c0_18 = arith.constant 0 : index
    %c0_19 = arith.constant 0 : index
    %35 = vector.load %arg7[%c0_18, %c0_19] : memref<1x128xf32, #tpu.memory_space<vmem>>, vector<1x128xf32>
    %36 = vector.broadcast %35 : vector<1x128xf32> to vector<16x128xf32>
    %37 = arith.addf %34, %36 : vector<16x128xf32>
    %c0_20 = arith.constant 0 : index
    %c0_21 = arith.constant 0 : index
    %38 = vector.load %arg8[%c0_20, %c0_21] : memref<1x128xf32, #tpu.memory_space<vmem>>, vector<1x128xf32>
    %c0_22 = arith.constant 0 : index
    %c0_23 = arith.constant 0 : index
    %39 = vector.load %arg9[%c0_22, %c0_23] : memref<1x128xf32, #tpu.memory_space<vmem>>, vector<1x128xf32>
    %cst_24 = arith.constant dense<0.000000e+00> : vector<16xf32>
    %40 = vector.multi_reduction <add>, %37, %cst_24 [1] : vector<16x128xf32> to vector<16xf32>
    %41 = vector.shape_cast %40 : vector<16xf32> to vector<16x1xf32>
    %42 = arith.mulf %37, %37 : vector<16x128xf32>
    %cst_25 = arith.constant dense<0.000000e+00> : vector<16xf32>
    %43 = vector.multi_reduction <add>, %42, %cst_25 [1] : vector<16x128xf32> to vector<16xf32>
    %44 = vector.shape_cast %43 : vector<16xf32> to vector<16x1xf32>
    %cst_26 = arith.constant 7.812500e-03 : f32
    %45 = vector.broadcast %cst_26 : f32 to vector<16x1xf32>
    %46 = arith.mulf %41, %45 : vector<16x1xf32>
    %cst_27 = arith.constant 7.812500e-03 : f32
    %47 = vector.broadcast %cst_27 : f32 to vector<16x1xf32>
    %48 = arith.mulf %44, %47 : vector<16x1xf32>
    %49 = arith.mulf %46, %46 : vector<16x1xf32>
    %50 = arith.subf %48, %49 : vector<16x1xf32>
    %51 = vector.broadcast %46 : vector<16x1xf32> to vector<16x128xf32>
    %52 = arith.subf %37, %51 : vector<16x128xf32>
    %cst_28 = arith.constant 9.99999974E-6 : f32
    %53 = vector.broadcast %cst_28 : f32 to vector<16x1xf32>
    %54 = arith.addf %50, %53 : vector<16x1xf32>
    %55 = math.rsqrt %54 : vector<16x1xf32>
    %56 = vector.broadcast %55 : vector<16x1xf32> to vector<16x128xf32>
    %57 = arith.mulf %52, %56 : vector<16x128xf32>
    %58 = vector.broadcast %38 : vector<1x128xf32> to vector<16x128xf32>
    %59 = arith.mulf %57, %58 : vector<16x128xf32>
    %60 = vector.broadcast %39 : vector<1x128xf32> to vector<16x128xf32>
    %61 = arith.addf %59, %60 : vector<16x128xf32>
    %cst_29 = arith.constant 0.000000e+00 : f32
    %62 = vector.broadcast %cst_29 : f32 to vector<16x128xf32>
    %63 = arith.maximumf %61, %62 : vector<16x128xf32>
    %64 = arith.truncf %63 : vector<16x128xf32> to vector<16x128xbf16>
    %c0_30 = arith.constant 0 : index
    %c0_31 = arith.constant 0 : index
    %65 = vector.load %arg10[%c0_30, %c0_31] : memref<128x256xbf16, #tpu.memory_space<vmem>>, vector<128x256xbf16>
    %cst_32 = arith.constant dense<0.000000e+00> : vector<16x256xf32>
    %66 = tpu.matmul %64, %65, %cst_32 {dimension_numbers = #tpu.dot_dimension_numbers<[1], [0], [0], [1], [0, 0, 1, 1], [], []>} : vector<16x128xbf16>, vector<128x256xbf16>, vector<16x256xf32> -> vector<16x256xf32>
    %c0_33 = arith.constant 0 : index
    %c0_34 = arith.constant 0 : index
    %67 = vector.load %arg11[%c0_33, %c0_34] : memref<1x256xf32, #tpu.memory_space<vmem>>, vector<1x256xf32>
    %68 = vector.broadcast %67 : vector<1x256xf32> to vector<16x256xf32>
    %69 = arith.addf %66, %68 : vector<16x256xf32>
    %70 = math.tanh %69 : vector<16x256xf32>
    %c0_35 = arith.constant 0 : index
    %c0_36 = arith.constant 0 : index
    %71 = vector.load %arg12[%c0_35, %c0_36] : memref<16x256xf32, #tpu.memory_space<vmem>>, vector<16x256xf32>
    tpu.vector_store %arg12[%c0_35, %c0_36], %70 {strides = array<i32>} : memref<16x256xf32, #tpu.memory_space<vmem>>, vector<16x256xf32>,
    return
  }
  func.func @transform_0(%arg0: i32) -> (i32, i32) {
    %c0_i32 = arith.constant 0 : i32
    %c0_i32_0 = arith.constant 0 : i32
    return %arg0, %c0_i32 : i32, i32
  }
  func.func @transform_1(%arg0: i32) -> (i32, i32) {
    %c0_i32 = arith.constant 0 : i32
    %c0_i32_0 = arith.constant 0 : i32
    %c0_i32_1 = arith.constant 0 : i32
    return %c0_i32, %c0_i32_0 : i32, i32
  }
  func.func @transform_2(%arg0: i32) -> (i32, i32) {
    %c0_i32 = arith.constant 0 : i32
    %c0_i32_0 = arith.constant 0 : i32
    %c0_i32_1 = arith.constant 0 : i32
    return %c0_i32, %c0_i32_0 : i32, i32
  }
  func.func @transform_3(%arg0: i32) -> (i32, i32) {
    %c0_i32 = arith.constant 0 : i32
    %c0_i32_0 = arith.constant 0 : i32
    %c0_i32_1 = arith.constant 0 : i32
    return %c0_i32, %c0_i32_0 : i32, i32
  }
  func.func @transform_4(%arg0: i32) -> (i32, i32) {
    %c0_i32 = arith.constant 0 : i32
    %c0_i32_0 = arith.constant 0 : i32
    %c0_i32_1 = arith.constant 0 : i32
    return %c0_i32, %c0_i32_0 : i32, i32
  }
  func.func @transform_5(%arg0: i32) -> (i32, i32) {
    %c0_i32 = arith.constant 0 : i32
    %c0_i32_0 = arith.constant 0 : i32
    %c0_i32_1 = arith.constant 0 : i32
    return %c0_i32, %c0_i32_0 : i32, i32
  }
  func.func @transform_6(%arg0: i32) -> (i32, i32) {
    %c0_i32 = arith.constant 0 : i32
    %c0_i32_0 = arith.constant 0 : i32
    %c0_i32_1 = arith.constant 0 : i32
    return %c0_i32, %c0_i32_0 : i32, i32
  }
  func.func @transform_7(%arg0: i32) -> (i32, i32) {
    %c0_i32 = arith.constant 0 : i32
    %c0_i32_0 = arith.constant 0 : i32
    %c0_i32_1 = arith.constant 0 : i32
    return %c0_i32, %c0_i32_0 : i32, i32
  }
  func.func @transform_8(%arg0: i32) -> (i32, i32) {
    %c0_i32 = arith.constant 0 : i32
    %c0_i32_0 = arith.constant 0 : i32
    %c0_i32_1 = arith.constant 0 : i32
    return %c0_i32, %c0_i32_0 : i32, i32
  }
  func.func @transform_9(%arg0: i32) -> (i32, i32) {
    %c0_i32 = arith.constant 0 : i32
    %c0_i32_0 = arith.constant 0 : i32
    %c0_i32_1 = arith.constant 0 : i32
    return %c0_i32, %c0_i32_0 : i32, i32
  }
  func.func @transform_10(%arg0: i32) -> (i32, i32) {
    %c0_i32 = arith.constant 0 : i32
    %c0_i32_0 = arith.constant 0 : i32
    %c0_i32_1 = arith.constant 0 : i32
    return %c0_i32, %c0_i32_0 : i32, i32
  }
  func.func @transform_11(%arg0: i32) -> (i32, i32) {
    %c0_i32 = arith.constant 0 : i32
    %c0_i32_0 = arith.constant 0 : i32
    return %arg0, %c0_i32 : i32, i32
  }
}

</mosaic_0001>

<llo_original>
// kernel: encoder_mlp.1
$region0: #{encoder_mlp.1}
  #allocation0 [shape = 'u32[]', space=smem, size = 0x4, offset = 0x4, fixed_abs, tag = 'smem constant byte address 0x4 - core index']
  #allocation1 [shape = 'u32[144,128]{1,0:T(1,128)}', space=vmem, size = 0x12000, scoped, tag = 'internal scratch']
  %s0 = inlined_call_operand.vmem [shape: bf16[16,32], index: 0, kind: input, shape index: {}]
  %s1 = inlined_call_operand.hbm [shape: bf16[32,64], index: 1, kind: input, shape index: {}]
  %s2 = inlined_call_operand.vmem [shape: f32[1,64], index: 2, kind: input, shape index: {}]
  %s3 = inlined_call_operand.vmem [shape: f32[1,64], index: 3, kind: input, shape index: {}]
  %s4 = inlined_call_operand.vmem [shape: f32[1,64], index: 4, kind: input, shape index: {}]
  %s5 = inlined_call_operand.vmem [shape: bf16[64,128], index: 5, kind: input, shape index: {}]
  %s6 = inlined_call_operand.vmem [shape: f32[1,128], index: 6, kind: input, shape index: {}]
  %s7 = inlined_call_operand.vmem [shape: f32[1,128], index: 7, kind: input, shape index: {}]
  %s8 = inlined_call_operand.vmem [shape: f32[1,128], index: 8, kind: input, shape index: {}]
  %s9 = inlined_call_operand.hbm [shape: bf16[128,256], index: 9, kind: input, shape index: {}]
  %s10 = inlined_call_operand.vmem [shape: f32[1,256], index: 10, kind: input, shape index: {}]
  %s11 = inlined_call_operand.hbm [shape: f32[16,256], index: 11, kind: output, shape index: {}]
  %s12 = sld [smem:[#allocation0]]
  $region62: #{encoder_mlp.1} parent=0
    _
  %s14 = ssub.s32 1, %s12
  %s15 = scalar_select 0, %s14, %s12
  $region1: #{encoder_mlp.1} parent=0
    #allocation2 [shape = 'u8[8192]{0}', space=vmem, size = 0x2000, scoped, tag = 'input window, operand 1, single buffered']
    #allocation3 [shape = 's32[1]{0}', space=sflag, size = 0x4, scoped, tag = 'scoped memory for encoder_mlp.1']
    #allocation4 [shape = 's32[1]{0}', space=sflag, size = 0x4, scoped, tag = 'scoped memory for encoder_mlp.1']
    #allocation5 [shape = 'u8[65536]{0}', space=vmem, size = 0x10000, scoped, tag = 'input window, operand 9, single buffered']
    #allocation6 [shape = 's32[1]{0}', space=sflag, size = 0x4, scoped, tag = 'scoped memory for encoder_mlp.1']
    #allocation7 [shape = 'u8[16384]{0}', space=vmem, size = 0x4000, scoped, tag = 'output window, operand 0, single buffered']
    %16 = vsyncpa [#allocation3], 0
    %17 = vsyncpa [#allocation6], 0
    %18 = vsyncpa [#allocation4], 0
    // Predicated region
    $region2: #{encoder_mlp.1} parent=1 // pred_check
      _
    $region3: #{encoder_mlp.1} parent=1 // pred_check_branch
      %20 = sbr.rel (0) target = $region5
    $region4: #{encoder_mlp.1} parent=1 // pred_region
      _
    $region5: #{encoder_mlp.1} parent=1 // pred_fallthru
      _
    // Predicated region
    $region6: #{encoder_mlp.1} parent=1 // pred_check
      _
    $region7: #{encoder_mlp.1} parent=1 // pred_check_branch
      %22 = sbr.rel (0) target = $region9
    $region8: #{encoder_mlp.1} parent=1 // pred_region
      %s24 = ssub.s32 256, 256
      %25 = vsyncadd [#allocation3], %s24
      %s26 = sshll.u32 [#allocation2], 4
      %s27 = int_to_ptr.vmem [resolvable:$true] %s26
      %32 = dma.hbm_to_vmem [thread:$0]  %s1, 256, %s27, [#allocation3], 64, 64, 4
    $region9: #{encoder_mlp.1} parent=1 // pred_fallthru
      _
    // Predicated region
    $region10: #{encoder_mlp.1} parent=1 // pred_check
      _
    $region11: #{encoder_mlp.1} parent=1 // pred_check_branch
      %34 = sbr.rel (0) target = $region13
    $region12: #{encoder_mlp.1} parent=1 // pred_region
      _
    $region13: #{encoder_mlp.1} parent=1 // pred_fallthru
      _
    // Predicated region
    $region14: #{encoder_mlp.1} parent=1 // pred_check
      _
    $region15: #{encoder_mlp.1} parent=1 // pred_check_branch
      %36 = sbr.rel (0) target = $region17
    $region16: #{encoder_mlp.1} parent=1 // pred_region
      _
    $region17: #{encoder_mlp.1} parent=1 // pred_fallthru
      _
    // Predicated region
    $region18: #{encoder_mlp.1} parent=1 // pred_check
      _
    $region19: #{encoder_mlp.1} parent=1 // pred_check_branch
      %38 = sbr.rel (0) target = $region21
    $region20: #{encoder_mlp.1} parent=1 // pred_region
      _
    $region21: #{encoder_mlp.1} parent=1 // pred_fallthru
      _
    // Predicated region
    $region22: #{encoder_mlp.1} parent=1 // pred_check
      _
    $region23: #{encoder_mlp.1} parent=1 // pred_check_branch
      %40 = sbr.rel (0) target = $region25
    $region24: #{encoder_mlp.1} parent=1 // pred_region
      _
    $region25: #{encoder_mlp.1} parent=1 // pred_fallthru
      _
    // Predicated region
    $region26: #{encoder_mlp.1} parent=1 // pred_check
      _
    $region27: #{encoder_mlp.1} parent=1 // pred_check_branch
      %42 = sbr.rel (0) target = $region29
    $region28: #{encoder_mlp.1} parent=1 // pred_region
      _
    $region29: #{encoder_mlp.1} parent=1 // pred_fallthru
      _
    // Predicated region
    $region30: #{encoder_mlp.1} parent=1 // pred_check
      _
    $region31: #{encoder_mlp.1} parent=1 // pred_check_branch
      %44 = sbr.rel (0) target = $region33
    $region32: #{encoder_mlp.1} parent=1 // pred_region
      _
    $region33: #{encoder_mlp.1} parent=1 // pred_fallthru
      _
    // Predicated region
    $region34: #{encoder_mlp.1} parent=1 // pred_check
      _
    $region35: #{encoder_mlp.1} parent=1 // pred_check_branch
      %46 = sbr.rel (0) target = $region37
    $region36: #{encoder_mlp.1} parent=1 // pred_region
      _
    $region37: #{encoder_mlp.1} parent=1 // pred_fallthru
      _
    // Predicated region
    $region38: #{encoder_mlp.1} parent=1 // pred_check
      _
    $region39: #{encoder_mlp.1} parent=1 // pred_check_branch
      %48 = sbr.rel (0) target = $region41
    $region40: #{encoder_mlp.1} parent=1 // pred_region
      %s50 = ssub.s32 2048, 2048
      %51 = vsyncadd [#allocation6], %s50
      %s52 = sshll.u32 [#allocation5], 4
      %s53 = int_to_ptr.vmem [resolvable:$true] %s52
      %58 = dma.hbm_to_vmem [thread:$0]  %s9, 2048, %s53, [#allocation6], 128, 128, 8
    $region41: #{encoder_mlp.1} parent=1 // pred_fallthru
      _
    // Predicated region
    $region42: #{encoder_mlp.1} parent=1 // pred_check
      _
    $region43: #{encoder_mlp.1} parent=1 // pred_check_branch
      %60 = sbr.rel (0) target = $region45
    $region44: #{encoder_mlp.1} parent=1 // pred_region
      _
    $region45: #{encoder_mlp.1} parent=1 // pred_fallthru
      _
    // Predicated region
    $region46: #{encoder_mlp.1} parent=1 // pred_check
      _
    $region47: #{encoder_mlp.1} parent=1 // pred_check_branch
      %62 = sbr.rel (0) target = $region49
    $region48: #{encoder_mlp.1} parent=1 // pred_region
      %63 = dma.done [#allocation3], 256
    $region49: #{encoder_mlp.1} parent=1 // pred_fallthru
      _
    // Predicated region
    $region50: #{encoder_mlp.1} parent=1 // pred_check
      _
    $region51: #{encoder_mlp.1} parent=1 // pred_check_branch
      %65 = sbr.rel (0) target = $region53
    $region52: #{encoder_mlp.1} parent=1 // pred_region
      %66 = dma.done [#allocation6], 2048
    $region53: #{encoder_mlp.1} parent=1 // pred_fallthru
      _
    %v68 = vld [vmem:[%s0] sm:$0xf]
    %v69 = vld [vmem:[%s0 + $0x4] sm:$0xf]
    %v70 = vld [vmem:[#allocation2] sm:$0xf]
    %v71 = vld [vmem:[#allocation2 + $0x4] sm:$0xf]
    %v72 = vld [vmem:[#allocation2 + $0x8] sm:$0xf]
    %v73 = vld [vmem:[#allocation2 + $0xc] sm:$0xf]
    %v74 = vld [vmem:[%s2] sm:$0x1]
    %v76 = vlaneseq
    %v77 = vshrl.u32 %v76, 7
    %v78 = vsub.s32 0, %v77
    %v79 = vrot.slane %v74, %v78
    %v83 = vunpack.c.l.b16 %v68
    %v84 = vunpack.c.l.b16 %v69
    %v85 = vpack.c.b16 %v84, %v83
    %v90 = vunpack.c.l.b16 %v70
    %v91 = vunpack.c.l.b16 %v71
    %v92 = vunpack.c.l.b16 %v72
    %v93 = vunpack.c.l.b16 %v73
    %v94 = vpack.c.b16 %v91, %v90
    %v95 = vpack.c.b16 %v93, %v92
    %vm98 = vcmask 261120
    %v100 = vsel %vm98, %v85, 0
    %102 = vmatprep.subr.bf16.mxu0 0
    %103 = vmatpush1.bf16.msra.mxu0 %v94
    %104 = vmatprep.subr.bf16.mxu0 0
    %105 = vmatpush1.bf16.msra.mxu0 %v95
    %106 = vmatprep.subr.bf16.mxu0 0
    %107 = vmatpush1.bf16.msra.mxu0 0
    %108 = vmatprep.subr.bf16.mxu0 0
    %109 = vmatpush1.bf16.msra.mxu0 0
    %110 = vmatprep.subr.bf16.mxu0 0
    %111 = vmatpush1.bf16.msra.mxu0 0
    %112 = vmatprep.subr.bf16.mxu0 0
    %113 = vmatpush1.bf16.msra.mxu0 0
    %114 = vmatprep.subr.bf16.mxu0 0
    %115 = vmatpush1.bf16.msra.mxu0 0
    %116 = vmatprep.subr.bf16.mxu0 0
    %117 = vmatpush1.bf16.msra.mxu0 0
    %118 = vmatprep.subr.bf16.mxu0 0
    %119 = vmatpush1.bf16.msra.mxu0 0
    %120 = vmatprep.subr.bf16.mxu0 0
    %121 = vmatpush1.bf16.msra.mxu0 0
    %122 = vmatprep.subr.bf16.mxu0 0
    %123 = vmatpush1.bf16.msra.mxu0 0
    %124 = vmatprep.subr.bf16.mxu0 0
    %125 = vmatpush1.bf16.msra.mxu0 0
    %126 = vmatprep.subr.bf16.mxu0 0
    %127 = vmatpush1.bf16.msra.mxu0 0
    %128 = vmatprep.subr.bf16.mxu0 0
    %129 = vmatpush1.bf16.msra.mxu0 0
    %130 = vmatprep.subr.bf16.mxu0 0
    %131 = vmatpush1.bf16.msra.mxu0 0
    %132 = vmatprep.subr.bf16.mxu0 0
    %133 = vmatpush1.bf16.msra.mxu0 0
    %134 = vmatprep.mubr.bf16.mxu0 0
    %135 = vmatmul.mubr.bf16.gmra.mrb[0].mxu0 %v100
    %v136 = vpop.f32.mrb[0].mxu0
    %v137 = vadd.f32 %v79, %v136
    %v138 = vpop.f32.mrb[0].mxu0
    %v139 = vpop.f32.mrb[0].mxu0
    %v140 = vadd.f32 %v79, %v139
    %v141 = vpop.f32.mrb[0].mxu0
    %142 = vdwg.mxu0
    %v143 = vld [vmem:[%s3] sm:$0x1]
    %v144 = vld [vmem:[%s4] sm:$0x1]
    %vm145 = vcmask 523264
    %v146 = vsel %vm145, %v137, 0.0
    %147 = vadd.xlane.f32.xlu0 %v146
    %v148 = vpop.xlane.xlu0 %147
    %v149 = vsel %vm145, %v140, 0.0
    %150 = vadd.xlane.f32.xlu0 %v149
    %v151 = vpop.xlane.xlu0 %150
    %v152 = vmul.f32 %v137, %v137
    %v153 = vmul.f32 %v140, %v140
    %v154 = vsel %vm145, %v152, 0.0
    %155 = vadd.xlane.f32.xlu0 %v154
    %v156 = vpop.xlane.xlu0 %155
    %v157 = vsel %vm145, %v153, 0.0
    %158 = vadd.xlane.f32.xlu0 %v157
    %v159 = vpop.xlane.xlu0 %158
    %v160 = vmul.f32 %v148, 0.015625
    %v161 = vmul.f32 %v151, 0.015625
    %v162 = vmul.f32 %v156, 0.015625
    %v163 = vmul.f32 %v159, 0.015625
    %v164 = vmul.f32 %v160, %v160
    %v165 = vmul.f32 %v161, %v161
    %v166 = vsub.f32 %v162, %v164
    %v167 = vsub.f32 %v163, %v165
    %v168 = vsub.f32 %v137, %v160
    %v169 = vsub.f32 %v140, %v161
    %v170 = vadd.f32 %v166, 1e-05
    %v171 = vadd.f32 %v167, 1e-05
    %v172 = vrsqrt.pop %v170
    %v173 = vrsqrt.pop %v171
    %v174 = vmul.f32 %v168, %v172
    %v175 = vmul.f32 %v169, %v173
    %v177 = vlaneseq
    %v178 = vshrl.u32 %v177, 7
    %v179 = vsub.s32 0, %v178
    %v180 = vrot.slane %v143, %v179
    %v182 = vmul.f32 %v174, %v180
    %v183 = vmul.f32 %v175, %v180
    %v185 = vlaneseq
    %v186 = vshrl.u32 %v185, 7
    %v187 = vsub.s32 0, %v186
    %v188 = vrot.slane %v144, %v187
    %v190 = vadd.f32 %v182, %v188
    %v191 = vadd.f32 %v183, %v188
    %v192 = vmax.f32 %v190, 0.0
    %v193 = vmax.f32 %v191, 0.0
    %v194 = vpack.c.bf16 %v193, %v192
    %v195 = vld [vmem:[%s5] sm:$0xf]
    %v196 = vld [vmem:[%s5 + $0x4] sm:$0xf]
    %v197 = vld [vmem:[%s5 + $0x8] sm:$0xf]
    %v198 = vld [vmem:[%s5 + $0xc] sm:$0xf]
    %v199 = vld [vmem:[%s5 + $0x10] sm:$0xf]
    %v200 = vld [vmem:[%s5 + $0x14] sm:$0xf]
    %v201 = vld [vmem:[%s5 + $0x18] sm:$0xf]
    %v202 = vld [vmem:[%s5 + $0x1c] sm:$0xf]
    %v203 = vld [vmem:[%s6] sm:$0x1]
    %v205 = vlaneseq
    %v206 = vshrl.u32 %v205, 7
    %v207 = vsub.s32 0, %v206
    %v208 = vrot.slane %v203, %v207
    %v218 = vunpack.c.l.b16 %v195
    %v219 = vunpack.c.l.b16 %v196
    %v220 = vunpack.c.l.b16 %v197
    %v221 = vunpack.c.l.b16 %v198
    %v222 = vunpack.c.l.b16 %v199
    %v223 = vunpack.c.l.b16 %v200
    %v224 = vunpack.c.l.b16 %v201
    %v225 = vunpack.c.l.b16 %v202
    %v226 = vpack.c.b16 %v219, %v218
    %v227 = vpack.c.b16 %v221, %v220
    %v228 = vpack.c.b16 %v223, %v222
    %v229 = vpack.c.b16 %v225, %v224
    %v235 = vsel %vm145, %v194, 0
    %237 = vmatprep.subr.bf16.mxu0 0
    %238 = vmatpush1.bf16.msra.mxu0 %v226
    %239 = vmatprep.subr.bf16.mxu0 0
    %240 = vmatpush1.bf16.msra.mxu0 %v227
    %241 = vmatprep.subr.bf16.mxu0 0
    %242 = vmatpush1.bf16.msra.mxu0 %v228
    %243 = vmatprep.subr.bf16.mxu0 0
    %244 = vmatpush1.bf16.msra.mxu0 %v229
    %245 = vmatprep.subr.bf16.mxu0 0
    %246 = vmatpush1.bf16.msra.mxu0 0
    %247 = vmatprep.subr.bf16.mxu0 0
    %248 = vmatpush1.bf16.msra.mxu0 0
    %249 = vmatprep.subr.bf16.mxu0 0
    %250 = vmatpush1.bf16.msra.mxu0 0
    %251 = vmatprep.subr.bf16.mxu0 0
    %252 = vmatpush1.bf16.msra.mxu0 0
    %253 = vmatprep.subr.bf16.mxu0 0
    %254 = vmatpush1.bf16.msra.mxu0 0
    %255 = vmatprep.subr.bf16.mxu0 0
    %256 = vmatpush1.bf16.msra.mxu0 0
    %257 = vmatprep.subr.bf16.mxu0 0
    %258 = vmatpush1.bf16.msra.mxu0 0
    %259 = vmatprep.subr.bf16.mxu0 0
    %260 = vmatpush1.bf16.msra.mxu0 0
    %261 = vmatprep.subr.bf16.mxu0 0
    %262 = vmatpush1.bf16.msra.mxu0 0
    %263 = vmatprep.subr.bf16.mxu0 0
    %264 = vmatpush1.bf16.msra.mxu0 0
    %265 = vmatprep.subr.bf16.mxu0 0
    %266 = vmatpush1.bf16.msra.mxu0 0
    %267 = vmatprep.subr.bf16.mxu0 0
    %268 = vmatpush1.bf16.msra.mxu0 0
    %269 = vmatprep.mubr.bf16.mxu0 0
    %270 = vmatmul.mubr.bf16.gmra.mrb[0].mxu0 %v235
    %v271 = vpop.f32.mrb[0].mxu0
    %v272 = vadd.f32 %v208, %v271
    %v273 = vpop.f32.mrb[0].mxu0
    %v274 = vpop.f32.mrb[0].mxu0
    %v275 = vadd.f32 %v208, %v274
    %v276 = vpop.f32.mrb[0].mxu0
    %277 = vdwg.mxu0
    %v278 = vld [vmem:[%s7] sm:$0x1]
    %v279 = vld [vmem:[%s8] sm:$0x1]
    %280 = vadd.xlane.f32.xlu0 %v272
    %v281 = vpop.xlane.xlu0 %280
    %282 = vadd.xlane.f32.xlu0 %v275
    %v283 = vpop.xlane.xlu0 %282
    %v284 = vmul.f32 %v272, %v272
    %v285 = vmul.f32 %v275, %v275
    %286 = vadd.xlane.f32.xlu0 %v284
    %v287 = vpop.xlane.xlu0 %286
    %288 = vadd.xlane.f32.xlu0 %v285
    %v289 = vpop.xlane.xlu0 %288
    %v290 = vmul.f32 %v281, 0.0078125
    %v291 = vmul.f32 %v283, 0.0078125
    %v292 = vmul.f32 %v287, 0.0078125
    %v293 = vmul.f32 %v289, 0.0078125
    %v294 = vmul.f32 %v290, %v290
    %v295 = vmul.f32 %v291, %v291
    %v296 = vsub.f32 %v292, %v294
    %v297 = vsub.f32 %v293, %v295
    %v298 = vsub.f32 %v272, %v290
    %v299 = vsub.f32 %v275, %v291
    %v300 = vadd.f32 %v296, 1e-05
    %v301 = vadd.f32 %v297, 1e-05
    %v302 = vrsqrt.pop %v300
    %v303 = vrsqrt.pop %v301
    %v304 = vmul.f32 %v298, %v302
    %v305 = vmul.f32 %v299, %v303
    %v307 = vlaneseq
    %v308 = vshrl.u32 %v307, 7
    %v309 = vsub.s32 0, %v308
    %v310 = vrot.slane %v278, %v309
    %v312 = vmul.f32 %v304, %v310
    %v313 = vmul.f32 %v305, %v310
    %v315 = vlaneseq
    %v316 = vshrl.u32 %v315, 7
    %v317 = vsub.s32 0, %v316
    %v318 = vrot.slane %v279, %v317
    %v320 = vadd.f32 %v312, %v318
    %v321 = vadd.f32 %v313, %v318
    %v322 = vmax.f32 %v320, 0.0
    %v323 = vmax.f32 %v321, 0.0
    %v324 = vpack.c.bf16 %v323, %v322
    %v325 = vld [vmem:[#allocation5] sm:$0xff]
    %v326 = vld [vmem:[#allocation5 + $0x8] sm:$0xff]
    %v327 = vld [vmem:[#allocation5 + $0x10] sm:$0xff]
    %v328 = vld [vmem:[#allocation5 + $0x18] sm:$0xff]
    %v329 = vld [vmem:[#allocation5 + $0x20] sm:$0xff]
    %v330 = vld [vmem:[#allocation5 + $0x28] sm:$0xff]
    %v331 = vld [vmem:[#allocation5 + $0x30] sm:$0xff]
    %v332 = vld [vmem:[#allocation5 + $0x38] sm:$0xff]
    %v333 = vld [vmem:[#allocation5 + $0x40] sm:$0xff]
    %v334 = vld [vmem:[#allocation5 + $0x48] sm:$0xff]
    %v335 = vld [vmem:[#allocation5 + $0x50] sm:$0xff]
    %v336 = vld [vmem:[#allocation5 + $0x58] sm:$0xff]
    %v337 = vld [vmem:[#allocation5 + $0x60] sm:$0xff]
    %v338 = vld [vmem:[#allocation5 + $0x68] sm:$0xff]
    %v339 = vld [vmem:[#allocation5 + $0x70] sm:$0xff]
    %v340 = vld [vmem:[#allocation5 + $0x78] sm:$0xff]
    %v341 = vld [vmem:[%s10] sm:$0x3]
    %v343 = vlaneseq
    %v344 = vshrl.u32 %v343, 7
    %v345 = vsub.s32 0, %v344
    %v346 = vrot.slane %v341, %v345
    %v347 = vlaneseq
    %v348 = vshrl.u32 %v347, 7
    %v349 = vsub.s32 1, %v348
    %v350 = vrot.slane %v341, %v349
    %v369 = vunpack.c.l.b16 %v325
    %v370 = vunpack.c.h.b16 %v325
    %v371 = vunpack.c.l.b16 %v326
    %v372 = vunpack.c.h.b16 %v326
    %v373 = vunpack.c.l.b16 %v327
    %v374 = vunpack.c.h.b16 %v327
    %v375 = vunpack.c.l.b16 %v328
    %v376 = vunpack.c.h.b16 %v328
    %v377 = vunpack.c.l.b16 %v329
    %v378 = vunpack.c.h.b16 %v329
    %v379 = vunpack.c.l.b16 %v330
    %v380 = vunpack.c.h.b16 %v330
    %v381 = vunpack.c.l.b16 %v331
    %v382 = vunpack.c.h.b16 %v331
    %v383 = vunpack.c.l.b16 %v332
    %v384 = vunpack.c.h.b16 %v332
    %v385 = vunpack.c.l.b16 %v333
    %v386 = vunpack.c.h.b16 %v333
    %v387 = vunpack.c.l.b16 %v334
    %v388 = vunpack.c.h.b16 %v334
    %v389 = vunpack.c.l.b16 %v335
    %v390 = vunpack.c.h.b16 %v335
    %v391 = vunpack.c.l.b16 %v336
    %v392 = vunpack.c.h.b16 %v336
    %v393 = vunpack.c.l.b16 %v337
    %v394 = vunpack.c.h.b16 %v337
    %v395 = vunpack.c.l.b16 %v338
    %v396 = vunpack.c.h.b16 %v338
    %v397 = vunpack.c.l.b16 %v339
    %v398 = vunpack.c.h.b16 %v339
    %v399 = vunpack.c.l.b16 %v340
    %v400 = vunpack.c.h.b16 %v340
    %v401 = vpack.c.b16 %v371, %v369
    %v402 = vpack.c.b16 %v372, %v370
    %v403 = vpack.c.b16 %v375, %v373
    %v404 = vpack.c.b16 %v376, %v374
    %v405 = vpack.c.b16 %v379, %v377
    %v406 = vpack.c.b16 %v380, %v378
    %v407 = vpack.c.b16 %v383, %v381
    %v408 = vpack.c.b16 %v384, %v382
    %v409 = vpack.c.b16 %v387, %v385
    %v410 = vpack.c.b16 %v388, %v386
    %v411 = vpack.c.b16 %v391, %v389
    %v412 = vpack.c.b16 %v392, %v390
    %v413 = vpack.c.b16 %v395, %v393
    %v414 = vpack.c.b16 %v396, %v394
    %v415 = vpack.c.b16 %v399, %v397
    %v416 = vpack.c.b16 %v400, %v398
    %433 = vmatprep.subr.bf16.mxu0 %v402
    %434 = vmatpush1.bf16.msra.mxu0 %v401
    %435 = vmatprep.subr.bf16.mxu0 %v404
    %436 = vmatpush1.bf16.msra.mxu0 %v403
    %437 = vmatprep.subr.bf16.mxu0 %v406
    %438 = vmatpush1.bf16.msra.mxu0 %v405
    %439 = vmatprep.subr.bf16.mxu0 %v408
    %440 = vmatpush1.bf16.msra.mxu0 %v407
    %441 = vmatprep.subr.bf16.mxu0 %v410
    %442 = vmatpush1.bf16.msra.mxu0 %v409
    %443 = vmatprep.subr.bf16.mxu0 %v412
    %444 = vmatpush1.bf16.msra.mxu0 %v411
    %445 = vmatprep.subr.bf16.mxu0 %v414
    %446 = vmatpush1.bf16.msra.mxu0 %v413
    %447 = vmatprep.subr.bf16.mxu0 %v416
    %448 = vmatpush1.bf16.msra.mxu0 %v415
    %449 = vmatprep.subr.bf16.mxu0 0
    %450 = vmatpush1.bf16.msra.mxu0 0
    %451 = vmatprep.subr.bf16.mxu0 0
    %452 = vmatpush1.bf16.msra.mxu0 0
    %453 = vmatprep.subr.bf16.mxu0 0
    %454 = vmatpush1.bf16.msra.mxu0 0
    %455 = vmatprep.subr.bf16.mxu0 0
    %456 = vmatpush1.bf16.msra.mxu0 0
    %457 = vmatprep.subr.bf16.mxu0 0
    %458 = vmatpush1.bf16.msra.mxu0 0
    %459 = vmatprep.subr.bf16.mxu0 0
    %460 = vmatpush1.bf16.msra.mxu0 0
    %461 = vmatprep.subr.bf16.mxu0 0
    %462 = vmatpush1.bf16.msra.mxu0 0
    %463 = vmatprep.subr.bf16.mxu0 0
    %464 = vmatpush1.bf16.msra.mxu0 0
    %465 = vmatprep.mubr.bf16.mxu0 0
    %466 = vmatmul.mubr.bf16.gmra.mrb[0].mxu0 %v324
    %v467 = vpop.f32.mrb[0].mxu0
    %v468 = vadd.f32 %v346, %v467
    %v469 = vpop.f32.mrb[0].mxu0
    %v470 = vadd.f32 %v350, %v469
    %v471 = vpop.f32.mrb[0].mxu0
    %v472 = vadd.f32 %v346, %v471
    %v473 = vpop.f32.mrb[0].mxu0
    %v474 = vadd.f32 %v350, %v473
    %475 = vdwg.mxu0
    %v476 = vtanh.pop %v468
    %v477 = vtanh.pop %v470
    %v478 = vtanh.pop %v472
    %v479 = vtanh.pop %v474
    %480 = vst [vmem:[#allocation7] sm:$0xff] %v476
    %481 = vst [vmem:[#allocation7 + $0x8] sm:$0xff] %v477
    %482 = vst [vmem:[#allocation7 + $0x10] sm:$0xff] %v478
    %483 = vst [vmem:[#allocation7 + $0x18] sm:$0xff] %v479
    // Predicated region
    $region54: #{encoder_mlp.1} parent=1 // pred_check
      _
    $region55: #{encoder_mlp.1} parent=1 // pred_check_branch
      %485 = sbr.rel (0) target = $region57
    $region56: #{encoder_mlp.1} parent=1 // pred_region
      %s487 = ssub.s32 512, 512
      %488 = vsyncadd [#allocation4], %s487
      %s489 = sshll.u32 [#allocation7], 4
      %s490 = int_to_ptr.vmem [resolvable:$true] %s489
      %495 = dma.vmem_to_hbm [thread:$0]  %s490, 512, %s11, [#allocation4], 256, 256, 16
    $region57: #{encoder_mlp.1} parent=1 // pred_fallthru
      _
    // Predicated region
    $region58: #{encoder_mlp.1} parent=1 // pred_check
      _
    $region59: #{encoder_mlp.1} parent=1 // pred_check_branch
      %497 = sbr.rel (0) target = $region61
    $region60: #{encoder_mlp.1} parent=1 // pred_region
      %498 = dma.done [#allocation4], 512
    $region61: #{encoder_mlp.1} parent=1 // pred_fallthru
      _
    %499 = vsyncpa [#allocation3], 1
    %500 = vsyncpa [#allocation6], 1
    %501 = vsyncpa [#allocation4], 1

</llo_original>
